<compile_context>
chip_gen: v7x
topology: tpu7x:2x2x1
jax: 0.10.0
libtpu: 0.0.40
codegen_flags: <defaults>
</compile_context>

<pallas_src>
import functools

import jax
import jax.numpy as jnp
from jax import lax
from jax.experimental import pallas as pl
from jax.experimental.pallas import tpu as pltpu


def _round_up(n, m):
    return ((n + m - 1) // m) * m


# ----------------------------- Pallas kernel ------------------------------ #
def _mlp_kernel(x_ref, w1_ref, b1_ref, w2_ref, b2_ref, w3_ref, b3_ref, o_ref,
                *, transpose_out):
    # Contract the feature axis of both operands: (rows, feat) x (out, feat).
    dn = (((1,), (1,)), ((), ()))

    x = x_ref[...]

    # fc1 + ReLU (dropout = identity in eval mode).
    h1 = lax.dot_general(x, w1_ref[...], dn, preferred_element_type=jnp.float32)
    h1 = jnp.maximum(h1 + b1_ref[...], 0.0)

    # fc2 + ReLU (dropout = identity in eval mode).
    h2 = lax.dot_general(h1.astype(w2_ref.dtype), w2_ref[...], dn,
                         preferred_element_type=jnp.float32)
    h2 = jnp.maximum(h2 + b2_ref[...], 0.0)

    # fc3 + sigmoid.
    if transpose_out:
        # (out=1, feat) x (TILE_B, feat) -> (1, TILE_B): batch on the lane axis,
        # so the final store is lane-dense and no XLU transpose is needed.
        logits = lax.dot_general(w3_ref[...], h2.astype(w3_ref.dtype), dn,
                                 preferred_element_type=jnp.float32)
    else:
        logits = lax.dot_general(h2.astype(w3_ref.dtype), w3_ref[...], dn,
                                 preferred_element_type=jnp.float32)
    logits = logits + b3_ref[...]
    o_ref[...] = jax.nn.sigmoid(logits).astype(o_ref.dtype)


# ---------------------------- Param preparation ---------------------------- #
def prepare_params(params, use_bf16=False):
    """Pad hidden widths to 128 lanes (once) and reshape biases to rows.

    Weights stay in PyTorch (out_features, in_features) layout.
    """
    w1, b1 = params["w1"], params["b1"]          # (h1, in),  (h1,)
    w2, b2 = params["w2"], params["b2"]          # (h2, h1),  (h2,)
    w3, b3 = params["w3"], params["b3"]          # (out, h2), (out,)

    h1, in_size = w1.shape
    h2 = w2.shape[0]
    out_size = w3.shape[0]
    h1p = _round_up(h1, 128)
    h2p = _round_up(h2, 128)

    w1p = jnp.zeros((h1p, in_size), jnp.float32).at[:h1, :].set(w1)
    b1p = jnp.zeros((1, h1p), jnp.float32).at[0, :h1].set(b1)
    w2p = jnp.zeros((h2p, h1p), jnp.float32).at[:h2, :h1].set(w2)
    b2p = jnp.zeros((1, h2p), jnp.float32).at[0, :h2].set(b2)
    w3p = jnp.zeros((out_size, h2p), jnp.float32).at[:, :h2].set(w3)
    b3p = b3[None, :].astype(jnp.float32)

    wdt = jnp.bfloat16 if use_bf16 else jnp.float32
    return {"w1": w1p.astype(wdt), "b1": b1p,
            "w2": w2p.astype(wdt), "b2": b2p,
            "w3": w3p.astype(wdt), "b3": b3p}


# ------------------------------- Wrapper ----------------------------------- #
@jax.jit
def single_layer_classifier_forward(x, prep):
    """Forward pass. x: (B, input_size) f32; prep: prepare_params() output.

    Returns (B,) for output_size == 1 (mirrors torch's .squeeze(1)),
    else (B, output_size).
    """
    w1, b1 = prep["w1"], prep["b1"]
    w2, b2 = prep["w2"], prep["b2"]
    w3, b3 = prep["w3"], prep["b3"]

    B, in_size = x.shape
    out_size = w3.shape[0]

    # Match MXU input dtype (bf16 halves the only B-scaling DMA: x).
    x = x.astype(w1.dtype)

    # Batch tile: multiple of 128 (lane-dense output + MXU rows), cap 1024.
    TILE_B = min(_round_up(B, 128), 1024)
    Bp = _round_up(B, TILE_B)
    if Bp != B:
        x = jnp.pad(x, ((0, Bp - B), (0, 0)))

    grid = (Bp // TILE_B,)
    transpose_out = (out_size == 1)

    def resident(shape):
        # Constant block index => weight/bias stays in VMEM across grid steps.
        return pl.BlockSpec(shape, lambda i: (0, 0))

    in_specs = [
        pl.BlockSpec((TILE_B, in_size), lambda i: (i, 0)),
        resident(w1.shape), resident(b1.shape),
        resident(w2.shape), resident(b2.shape),
        resident(w3.shape), resident(b3.shape),
    ]
    if transpose_out:
        out_shape = jax.ShapeDtypeStruct((1, Bp), jnp.float32)
        out_spec = pl.BlockSpec((1, TILE_B), lambda i: (0, i))
    else:
        out_shape = jax.ShapeDtypeStruct((Bp, out_size), jnp.float32)
        out_spec = pl.BlockSpec((TILE_B, out_size), lambda i: (i, 0))

    h1p, h2p = w1.shape[0], w2.shape[0]
    weight_bytes = sum(int(a.size) * a.dtype.itemsize
                       for a in (w1, b1, w2, b2, w3, b3))
    bytes_accessed = (Bp * in_size * x.dtype.itemsize + weight_bytes
                      + Bp * out_size * 4)
    cost = pl.CostEstimate(
        flops=2 * Bp * (in_size * h1p + h1p * h2p + h2p * out_size),
        transcendentals=Bp * out_size,
        bytes_accessed=bytes_accessed,
    )

    # Double-buffered x/out tiles + resident weights + f32 intermediates,
    # with headroom; capped below v7x's 64 MiB physical VMEM.
    vmem_limit = min(
        64 * 1024 * 1024,
        weight_bytes
        + 2 * TILE_B * in_size * x.dtype.itemsize
        + 2 * TILE_B * max(out_size, 1) * 4
        + 3 * TILE_B * max(h1p, h2p) * 4
        + (4 << 20),
    )

    out = pl.pallas_call(
        functools.partial(_mlp_kernel, transpose_out=transpose_out),
        out_shape=out_shape,
        grid=grid,
        in_specs=in_specs,
        out_specs=out_spec,
        compiler_params=pltpu.CompilerParams(
            dimension_semantics=("parallel",),   # megacore split on v7x
            vmem_limit_bytes=int(vmem_limit),
        ),
        cost_estimate=cost,
    )(x, w1, b1, w2, b2, w3, b3)

    if transpose_out:
        return out[0, :B]          # (B,)  == torch .squeeze(1)
    return out[:B]                  # (B, out); squeeze(1) is a no-op here


# --------------------------- Parameter creation ---------------------------- #
def init_params(key, input_size, output_size):
    """Deterministic init mimicking nn.Linear default (uniform +-1/sqrt(fan_in))."""
    def linear_init(k, out_f, in_f):
        kw, kb = jax.random.split(k)
        bound = 1.0 / jnp.sqrt(jnp.float32(in_f))
        w = jax.random.uniform(kw, (out_f, in_f), jnp.float32, -bound, bound)
        b = jax.random.uniform(kb, (out_f,), jnp.float32, -bound, bound)
        return w, b

    k1, k2, k3 = jax.random.split(key, 3)
    w1, b1 = linear_init(k1, 70, input_size)
    w2, b2 = linear_init(k2, 30, 70)
    w3, b3 = linear_init(k3, output_size, 30)
    return {"w1": w1, "b1": b1, "w2": w2, "b2": b2, "w3": w3, "b3": b3}


# ---------------------------------- Main ----------------------------------- #
if __name__ == "__main__":
    key = jax.random.PRNGKey(0)
    k_params, k_x = jax.random.split(key)

    batch = 8
    input_size = 32
    output_size = 1   # module ends with .squeeze(1) -> binary classifier head

    params = init_params(k_params, input_size, output_size)
    x = jax.random.normal(k_x, (batch, input_size), jnp.float32)

    # Plain-JAX reference (eval-mode dropout = identity).
    h1 = jnp.maximum(x @ params["w1"].T + params["b1"], 0.0)
    h2 = jnp.maximum(h1 @ params["w2"].T + params["b2"], 0.0)
    ref = jax.nn.sigmoid(h2 @ params["w3"].T + params["b3"]).squeeze(1)

    # f32 MXU path (tight tolerance).
    prep_f32 = prepare_params(params, use_bf16=False)
    y_f32 = jax.block_until_ready(single_layer_classifier_forward(x, prep_f32))
    assert y_f32.shape == (batch,), y_f32.shape
    assert jnp.allclose(y_f32, ref, atol=1e-5, rtol=1e-5), (y_f32, ref)

    # bf16 MXU-input path (f32 accumulation/activations; looser tolerance).
    prep_bf16 = prepare_params(params, use_bf16=True)
    y_bf16 = jax.block_until_ready(single_layer_classifier_forward(x, prep_bf16))
    assert y_bf16.shape == (batch,), y_bf16.shape
    assert jnp.allclose(y_bf16, ref, atol=5e-2, rtol=5e-2), (y_bf16, ref)

    print("KERNEL_OK")
</pallas_src>

<mosaic_0001>
module attributes {stable_mosaic.version = 11 : i64} {
  func.func @_mlp_kernel(%arg0: i32, %arg1: memref<128x32xf32, #tpu.memory_space<vmem>>, %arg2: memref<128x32xf32, #tpu.memory_space<vmem>>, %arg3: memref<1x128xf32, #tpu.memory_space<vmem>>, %arg4: memref<128x128xf32, #tpu.memory_space<vmem>>, %arg5: memref<1x128xf32, #tpu.memory_space<vmem>>, %arg6: memref<1x128xf32, #tpu.memory_space<vmem>>, %arg7: memref<1x1xf32, #tpu.memory_space<vmem>>, %arg8: memref<1x128xf32, #tpu.memory_space<vmem>>) attributes {dimension_semantics = [#tpu.dimension_semantics<parallel>], iteration_bounds = array<i64: 1>, scalar_prefetch = 0 : i64, scratch_operands = 0 : i64, tpu.core_type = #tpu.core_type<tc>, window_params = [{transform_indices = @transform_0, window_bounds = array<i64: 128, 32>}, {pipeline_mode = #tpu.pipeline_mode<synchronous>, transform_indices = @transform_1, window_bounds = array<i64: 128, 32>}, {pipeline_mode = #tpu.pipeline_mode<synchronous>, transform_indices = @transform_2, window_bounds = array<i64: 1, 128>}, {pipeline_mode = #tpu.pipeline_mode<synchronous>, transform_indices = @transform_3, window_bounds = array<i64: 128, 128>}, {pipeline_mode = #tpu.pipeline_mode<synchronous>, transform_indices = @transform_4, window_bounds = array<i64: 1, 128>}, {pipeline_mode = #tpu.pipeline_mode<synchronous>, transform_indices = @transform_5, window_bounds = array<i64: 1, 128>}, {pipeline_mode = #tpu.pipeline_mode<synchronous>, transform_indices = @transform_6, window_bounds = array<i64: 1, 1>}, {transform_indices = @transform_7, window_bounds = array<i64: 1, 128>}]} {
    %c0 = arith.constant 0 : index
    %c0_0 = arith.constant 0 : index
    %0 = vector.load %arg1[%c0, %c0_0] : memref<128x32xf32, #tpu.memory_space<vmem>>, vector<128x32xf32>
    %c0_1 = arith.constant 0 : index
    %c0_2 = arith.constant 0 : index
    %1 = vector.load %arg2[%c0_1, %c0_2] : memref<128x32xf32, #tpu.memory_space<vmem>>, vector<128x32xf32>
    %cst = arith.constant dense<0.000000e+00> : vector<128x128xf32>
    %2 = tpu.matmul %0, %1, %cst {dimension_numbers = #tpu.dot_dimension_numbers<[1], [1], [0], [0], [0, 0, 1, 0], [], []>} : vector<128x32xf32>, vector<128x32xf32>, vector<128x128xf32> -> vector<128x128xf32>
    %c0_3 = arith.constant 0 : index
    %c0_4 = arith.constant 0 : index
    %3 = vector.load %arg3[%c0_3, %c0_4] : memref<1x128xf32, #tpu.memory_space<vmem>>, vector<1x128xf32>
    %4 = vector.broadcast %3 : vector<1x128xf32> to vector<128x128xf32>
    %5 = arith.addf %2, %4 : vector<128x128xf32>
    %cst_5 = arith.constant 0.000000e+00 : f32
    %6 = vector.broadcast %cst_5 : f32 to vector<128x128xf32>
    %7 = arith.maximumf %5, %6 : vector<128x128xf32>
    %c0_6 = arith.constant 0 : index
    %c0_7 = arith.constant 0 : index
    %8 = vector.load %arg4[%c0_6, %c0_7] : memref<128x128xf32, #tpu.memory_space<vmem>>, vector<128x128xf32>
    %cst_8 = arith.constant dense<0.000000e+00> : vector<128x128xf32>
    %9 = tpu.matmul %7, %8, %cst_8 {dimension_numbers = #tpu.dot_dimension_numbers<[1], [1], [0], [0], [0, 0, 1, 0], [], []>} : vector<128x128xf32>, vector<128x128xf32>, vector<128x128xf32> -> vector<128x128xf32>
    %c0_9 = arith.constant 0 : index
    %c0_10 = arith.constant 0 : index
    %10 = vector.load %arg5[%c0_9, %c0_10] : memref<1x128xf32, #tpu.memory_space<vmem>>, vector<1x128xf32>
    %11 = vector.broadcast %10 : vector<1x128xf32> to vector<128x128xf32>
    %12 = arith.addf %9, %11 : vector<128x128xf32>
    %cst_11 = arith.constant 0.000000e+00 : f32
    %13 = vector.broadcast %cst_11 : f32 to vector<128x128xf32>
    %14 = arith.maximumf %12, %13 : vector<128x128xf32>
    %c0_12 = arith.constant 0 : index
    %c0_13 = arith.constant 0 : index
    %15 = vector.load %arg6[%c0_12, %c0_13] : memref<1x128xf32, #tpu.memory_space<vmem>>, vector<1x128xf32>
    %cst_14 = arith.constant dense<0.000000e+00> : vector<1x128xf32>
    %16 = tpu.matmul %15, %14, %cst_14 {dimension_numbers = #tpu.dot_dimension_numbers<[1], [1], [0], [0], [0, 0, 1, 0], [], []>} : vector<1x128xf32>, vector<128x128xf32>, vector<1x128xf32> -> vector<1x128xf32>
    %c0_15 = arith.constant 0 : index
    %c0_16 = arith.constant 0 : index
    %17 = vector.load %arg7[%c0_15, %c0_16] : memref<1x1xf32, #tpu.memory_space<vmem>>, vector<1x1xf32>
    %18 = vector.broadcast %17 : vector<1x1xf32> to vector<1x128xf32>
    %19 = arith.addf %16, %18 : vector<1x128xf32>
    %20 = arith.negf %19 : vector<1x128xf32>
    %21 = math.exp %20 : vector<1x128xf32>
    %cst_17 = arith.constant 1.000000e+00 : f32
    %22 = vector.broadcast %cst_17 : f32 to vector<1x128xf32>
    %23 = arith.addf %22, %21 : vector<1x128xf32>
    %24 = arith.divf %22, %23 : vector<1x128xf32>
    %c0_18 = arith.constant 0 : index
    %c0_19 = arith.constant 0 : index
    %25 = vector.load %arg8[%c0_18, %c0_19] : memref<1x128xf32, #tpu.memory_space<vmem>>, vector<1x128xf32>
    tpu.vector_store %arg8[%c0_18, %c0_19], %24 {strides = array<i32>} : memref<1x128xf32, #tpu.memory_space<vmem>>, vector<1x128xf32>,
    return
  }
  func.func @transform_0(%arg0: i32) -> (i32, i32) {
    %c0_i32 = arith.constant 0 : i32
    %c0_i32_0 = arith.constant 0 : i32
    return %arg0, %c0_i32 : i32, i32
  }
  func.func @transform_1(%arg0: i32) -> (i32, i32) {
    %c0_i32 = arith.constant 0 : i32
    %c0_i32_0 = arith.constant 0 : i32
    %c0_i32_1 = arith.constant 0 : i32
    return %c0_i32, %c0_i32_0 : i32, i32
  }
  func.func @transform_2(%arg0: i32) -> (i32, i32) {
    %c0_i32 = arith.constant 0 : i32
    %c0_i32_0 = arith.constant 0 : i32
    %c0_i32_1 = arith.constant 0 : i32
    return %c0_i32, %c0_i32_0 : i32, i32
  }
  func.func @transform_3(%arg0: i32) -> (i32, i32) {
    %c0_i32 = arith.constant 0 : i32
    %c0_i32_0 = arith.constant 0 : i32
    %c0_i32_1 = arith.constant 0 : i32
    return %c0_i32, %c0_i32_0 : i32, i32
  }
  func.func @transform_4(%arg0: i32) -> (i32, i32) {
    %c0_i32 = arith.constant 0 : i32
    %c0_i32_0 = arith.constant 0 : i32
    %c0_i32_1 = arith.constant 0 : i32
    return %c0_i32, %c0_i32_0 : i32, i32
  }
  func.func @transform_5(%arg0: i32) -> (i32, i32) {
    %c0_i32 = arith.constant 0 : i32
    %c0_i32_0 = arith.constant 0 : i32
    %c0_i32_1 = arith.constant 0 : i32
    return %c0_i32, %c0_i32_0 : i32, i32
  }
  func.func @transform_6(%arg0: i32) -> (i32, i32) {
    %c0_i32 = arith.constant 0 : i32
    %c0_i32_0 = arith.constant 0 : i32
    %c0_i32_1 = arith.constant 0 : i32
    return %c0_i32, %c0_i32_0 : i32, i32
  }
  func.func @transform_7(%arg0: i32) -> (i32, i32) {
    %c0_i32 = arith.constant 0 : i32
    %c0_i32_0 = arith.constant 0 : i32
    return %c0_i32, %arg0 : i32, i32
  }
}

</mosaic_0001>

<llo_original>
// kernel: single_layer_classifier_forward.1
$region0: #{single_layer_classifier_forward.1}
  #allocation0 [shape = 'u32[]', space=smem, size = 0x4, offset = 0x4, fixed_abs, tag = 'smem constant byte address 0x4 - core index']
  #allocation1 [shape = 'u32[144,128]{1,0:T(1,128)}', space=vmem, size = 0x12000, scoped, tag = 'internal scratch']
  #allocation2 [shape = 'f32[1,1]{1,0:T(1,128)S(1)}', space=vmem, size = 0x200, scoped, tag = 'scoped memory for single_layer_classifier_forward.1']
  %s0 = inlined_call_operand.vmem [shape: f32[128,32], index: 0, kind: input, shape index: {}]
  %s1 = inlined_call_operand.vmem [shape: f32[128,32], index: 1, kind: input, shape index: {}]
  %s2 = inlined_call_operand.vmem [shape: f32[1,128], index: 2, kind: input, shape index: {}]
  %s3 = inlined_call_operand.vmem [shape: f32[128,128], index: 3, kind: input, shape index: {}]
  %s4 = inlined_call_operand.vmem [shape: f32[1,128], index: 4, kind: input, shape index: {}]
  %s5 = inlined_call_operand.vmem [shape: f32[1,128], index: 5, kind: input, shape index: {}]
  %s6 = inlined_call_operand.<no memory space> [shape: f32[1,1], index: 6, kind: input, shape index: {}]
  %s7 = inlined_call_operand.vmem [shape: f32[1,128], index: 7, kind: output, shape index: {}]
  %s8 = sld [smem:[#allocation0]]
  $region38: #{single_layer_classifier_forward.1} parent=0
    _
  %s10 = ssub.s32 1, %s8
  %s11 = scalar_select 0, %s10, %s8
  %v12 = vstv %s6
  %13 = vst [vmem:[#allocation2] sm:$0x1] %v12
  // Predicated region
  $region2: #{single_layer_classifier_forward.1} parent=0 // pred_check
    _
  $region3: #{single_layer_classifier_forward.1} parent=0 // pred_check_branch
    %15 = sbr.rel (0) target = $region5
  $region4: #{single_layer_classifier_forward.1} parent=0 // pred_region
    _
  $region5: #{single_layer_classifier_forward.1} parent=0 // pred_fallthru
    _
  // Predicated region
  $region6: #{single_layer_classifier_forward.1} parent=0 // pred_check
    _
  $region7: #{single_layer_classifier_forward.1} parent=0 // pred_check_branch
    %17 = sbr.rel (0) target = $region9
  $region8: #{single_layer_classifier_forward.1} parent=0 // pred_region
    _
  $region9: #{single_layer_classifier_forward.1} parent=0 // pred_fallthru
    _
  // Predicated region
  $region10: #{single_layer_classifier_forward.1} parent=0 // pred_check
    _
  $region11: #{single_layer_classifier_forward.1} parent=0 // pred_check_branch
    %19 = sbr.rel (0) target = $region13
  $region12: #{single_layer_classifier_forward.1} parent=0 // pred_region
    _
  $region13: #{single_layer_classifier_forward.1} parent=0 // pred_fallthru
    _
  // Predicated region
  $region14: #{single_layer_classifier_forward.1} parent=0 // pred_check
    _
  $region15: #{single_layer_classifier_forward.1} parent=0 // pred_check_branch
    %21 = sbr.rel (0) target = $region17
  $region16: #{single_layer_classifier_forward.1} parent=0 // pred_region
    _
  $region17: #{single_layer_classifier_forward.1} parent=0 // pred_fallthru
    _
  // Predicated region
  $region18: #{single_layer_classifier_forward.1} parent=0 // pred_check
    _
  $region19: #{single_layer_classifier_forward.1} parent=0 // pred_check_branch
    %23 = sbr.rel (0) target = $region21
  $region20: #{single_layer_classifier_forward.1} parent=0 // pred_region
    _
  $region21: #{single_layer_classifier_forward.1} parent=0 // pred_fallthru
    _
  // Predicated region
  $region22: #{single_layer_classifier_forward.1} parent=0 // pred_check
    _
  $region23: #{single_layer_classifier_forward.1} parent=0 // pred_check_branch
    %25 = sbr.rel (0) target = $region25
  $region24: #{single_layer_classifier_forward.1} parent=0 // pred_region
    _
  $region25: #{single_layer_classifier_forward.1} parent=0 // pred_fallthru
    _
  // Predicated region
  $region26: #{single_layer_classifier_forward.1} parent=0 // pred_check
    _
  $region27: #{single_layer_classifier_forward.1} parent=0 // pred_check_branch
    %27 = sbr.rel (0) target = $region29
  $region28: #{single_layer_classifier_forward.1} parent=0 // pred_region
    _
  $region29: #{single_layer_classifier_forward.1} parent=0 // pred_fallthru
    _
  %v28 = vld [vmem:[%s0] sm:$0xff]
  %v29 = vld [vmem:[%s0 + $0x8] sm:$0xff]
  %v30 = vld [vmem:[%s0 + $0x10] sm:$0xff]
  %v31 = vld [vmem:[%s0 + $0x18] sm:$0xff]
  %v32 = vld [vmem:[%s0 + $0x20] sm:$0xff]
  %v33 = vld [vmem:[%s0 + $0x28] sm:$0xff]
  %v34 = vld [vmem:[%s0 + $0x30] sm:$0xff]
  %v35 = vld [vmem:[%s0 + $0x38] sm:$0xff]
  %v36 = vld [vmem:[%s0 + $0x40] sm:$0xff]
  %v37 = vld [vmem:[%s0 + $0x48] sm:$0xff]
  %v38 = vld [vmem:[%s0 + $0x50] sm:$0xff]
  %v39 = vld [vmem:[%s0 + $0x58] sm:$0xff]
  %v40 = vld [vmem:[%s0 + $0x60] sm:$0xff]
  %v41 = vld [vmem:[%s0 + $0x68] sm:$0xff]
  %v42 = vld [vmem:[%s0 + $0x70] sm:$0xff]
  %v43 = vld [vmem:[%s0 + $0x78] sm:$0xff]
  %v44 = vld [vmem:[%s1] sm:$0xff]
  %v45 = vld [vmem:[%s1 + $0x8] sm:$0xff]
  %v46 = vld [vmem:[%s1 + $0x10] sm:$0xff]
  %v47 = vld [vmem:[%s1 + $0x18] sm:$0xff]
  %v48 = vld [vmem:[%s1 + $0x20] sm:$0xff]
  %v49 = vld [vmem:[%s1 + $0x28] sm:$0xff]
  %v50 = vld [vmem:[%s1 + $0x30] sm:$0xff]
  %v51 = vld [vmem:[%s1 + $0x38] sm:$0xff]
  %v52 = vld [vmem:[%s1 + $0x40] sm:$0xff]
  %v53 = vld [vmem:[%s1 + $0x48] sm:$0xff]
  %v54 = vld [vmem:[%s1 + $0x50] sm:$0xff]
  %v55 = vld [vmem:[%s1 + $0x58] sm:$0xff]
  %v56 = vld [vmem:[%s1 + $0x60] sm:$0xff]
  %v57 = vld [vmem:[%s1 + $0x68] sm:$0xff]
  %v58 = vld [vmem:[%s1 + $0x70] sm:$0xff]
  %v59 = vld [vmem:[%s1 + $0x78] sm:$0xff]
  %v60 = vld [vmem:[%s2] sm:$0x1]
  %v62 = vlaneseq
  %v63 = vshrl.u32 %v62, 7
  %v64 = vsub.s32 0, %v63
  %v65 = vrot.slane %v60, %v64
  %vm67 = vcmask 261120
  %v69 = vsel %vm67, %v28, 0
  %v72 = vsel %vm67, %v29, 0
  %v75 = vsel %vm67, %v30, 0
  %v78 = vsel %vm67, %v31, 0
  %v81 = vsel %vm67, %v32, 0
  %v84 = vsel %vm67, %v33, 0
  %v87 = vsel %vm67, %v34, 0
  %v90 = vsel %vm67, %v35, 0
  %v93 = vsel %vm67, %v36, 0
  %v96 = vsel %vm67, %v37, 0
  %v99 = vsel %vm67, %v38, 0
  %v102 = vsel %vm67, %v39, 0
  %v105 = vsel %vm67, %v40, 0
  %v108 = vsel %vm67, %v41, 0
  %v111 = vsel %vm67, %v42, 0
  %v114 = vsel %vm67, %v43, 0
  %v117 = vsel %vm67, %v44, 0
  %v120 = vsel %vm67, %v45, 0
  %v123 = vsel %vm67, %v46, 0
  %v126 = vsel %vm67, %v47, 0
  %v129 = vsel %vm67, %v48, 0
  %v132 = vsel %vm67, %v49, 0
  %v135 = vsel %vm67, %v50, 0
  %v138 = vsel %vm67, %v51, 0
  %v141 = vsel %vm67, %v52, 0
  %v144 = vsel %vm67, %v53, 0
  %v147 = vsel %vm67, %v54, 0
  %v150 = vsel %vm67, %v55, 0
  %v153 = vsel %vm67, %v56, 0
  %v156 = vsel %vm67, %v57, 0
  %v159 = vsel %vm67, %v58, 0
  %v162 = vsel %vm67, %v59, 0
  %164 = vmatprep.subr.mxu0 0.0
  %165 = vmatpush1.xpose.msra.mxu0 %v117
  %166 = vmatprep.subr.mxu0 0.0
  %167 = vmatpush1.xpose.msra.mxu0 %v120
  %168 = vmatprep.subr.mxu0 0.0
  %169 = vmatpush1.xpose.msra.mxu0 %v123
  %170 = vmatprep.subr.mxu0 0.0
  %171 = vmatpush1.xpose.msra.mxu0 %v126
  %172 = vmatprep.subr.mxu0 0.0
  %173 = vmatpush1.xpose.msra.mxu0 %v129
  %174 = vmatprep.subr.mxu0 0.0
  %175 = vmatpush1.xpose.msra.mxu0 %v132
  %176 = vmatprep.subr.mxu0 0.0
  %177 = vmatpush1.xpose.msra.mxu0 %v135
  %178 = vmatprep.subr.mxu0 0.0
  %179 = vmatpush1.xpose.msra.mxu0 %v138
  %180 = vmatprep.subr.mxu0 0.0
  %181 = vmatpush1.xpose.msra.mxu0 %v141
  %182 = vmatprep.subr.mxu0 0.0
  %183 = vmatpush1.xpose.msra.mxu0 %v144
  %184 = vmatprep.subr.mxu0 0.0
  %185 = vmatpush1.xpose.msra.mxu0 %v147
  %186 = vmatprep.subr.mxu0 0.0
  %187 = vmatpush1.xpose.msra.mxu0 %v150
  %188 = vmatprep.subr.mxu0 0.0
  %189 = vmatpush1.xpose.msra.mxu0 %v153
  %190 = vmatprep.subr.mxu0 0.0
  %191 = vmatpush1.xpose.msra.mxu0 %v156
  %192 = vmatprep.subr.mxu0 0.0
  %193 = vmatpush1.xpose.msra.mxu0 %v159
  %194 = vmatprep.subr.mxu0 0.0
  %195 = vmatpush1.xpose.msra.mxu0 %v162
  %196 = vmatprep.subr.mxu0 0.0
  %197 = vmatpush1.xpose.msra.mxu0 0.0
  %198 = vmatprep.subr.mxu0 0.0
  %199 = vmatpush1.xpose.msra.mxu0 0.0
  %200 = vmatprep.subr.mxu0 0.0
  %201 = vmatpush1.xpose.msra.mxu0 0.0
  %202 = vmatprep.subr.mxu0 0.0
  %203 = vmatpush1.xpose.msra.mxu0 0.0
  %204 = vmatprep.subr.mxu0 0.0
  %205 = vmatpush1.xpose.msra.mxu0 0.0
  %206 = vmatprep.subr.mxu0 0.0
  %207 = vmatpush1.xpose.msra.mxu0 0.0
  %208 = vmatprep.subr.mxu0 0.0
  %209 = vmatpush1.xpose.msra.mxu0 0.0
  %210 = vmatprep.subr.mxu0 0.0
  %211 = vmatpush1.xpose.msra.mxu0 0.0
  %212 = vmatprep.subr.mxu0 0.0
  %213 = vmatpush1.xpose.msra.mxu0 0.0
  %214 = vmatprep.subr.mxu0 0.0
  %215 = vmatpush1.xpose.msra.mxu0 0.0
  %216 = vmatprep.subr.mxu0 0.0
  %217 = vmatpush1.xpose.msra.mxu0 0.0
  %218 = vmatprep.subr.mxu0 0.0
  %219 = vmatpush1.xpose.msra.mxu0 0.0
  %220 = vmatprep.subr.mxu0 0.0
  %221 = vmatpush1.xpose.msra.mxu0 0.0
  %222 = vmatprep.subr.mxu0 0.0
  %223 = vmatpush1.xpose.msra.mxu0 0.0
  %224 = vmatprep.subr.mxu0 0.0
  %225 = vmatpush1.xpose.msra.mxu0 0.0
  %226 = vmatprep.subr.mxu0 0.0
  %227 = vmatpush1.xpose.msra.mxu0 0.0
  %228 = vmatprep.mubr.f32.mxu0 0.0
  %229 = vmatmul.mubr.f32.gmra.mrb[0].mxu0 %v69
  %v230 = vpop.f32.mrb[0].mxu0
  %v231 = vadd.f32 %v65, %v230
  %v232 = vpop.f32.mrb[0].mxu0
  %233 = vmatprep.mubr.f32.mxu0 0.0
  %234 = vmatmul.mubr.f32.gmra.mrb[0].mxu0 %v72
  %v235 = vpop.f32.mrb[0].mxu0
  %v236 = vadd.f32 %v65, %v235
  %v237 = vpop.f32.mrb[0].mxu0
  %238 = vmatprep.mubr.f32.mxu0 0.0
  %239 = vmatmul.mubr.f32.gmra.mrb[0].mxu0 %v75
  %v240 = vpop.f32.mrb[0].mxu0
  %v241 = vadd.f32 %v65, %v240
  %v242 = vpop.f32.mrb[0].mxu0
  %243 = vmatprep.mubr.f32.mxu0 0.0
  %244 = vmatmul.mubr.f32.gmra.mrb[0].mxu0 %v78
  %v245 = vpop.f32.mrb[0].mxu0
  %v246 = vadd.f32 %v65, %v245
  %v247 = vpop.f32.mrb[0].mxu0
  %248 = vmatprep.mubr.f32.mxu0 0.0
  %249 = vmatmul.mubr.f32.gmra.mrb[0].mxu0 %v81
  %v250 = vpop.f32.mrb[0].mxu0
  %v251 = vadd.f32 %v65, %v250
  %v252 = vpop.f32.mrb[0].mxu0
  %253 = vmatprep.mubr.f32.mxu0 0.0
  %254 = vmatmul.mubr.f32.gmra.mrb[0].mxu0 %v84
  %v255 = vpop.f32.mrb[0].mxu0
  %v256 = vadd.f32 %v65, %v255
  %v257 = vpop.f32.mrb[0].mxu0
  %258 = vmatprep.mubr.f32.mxu0 0.0
  %259 = vmatmul.mubr.f32.gmra.mrb[0].mxu0 %v87
  %v260 = vpop.f32.mrb[0].mxu0
  %v261 = vadd.f32 %v65, %v260
  %v262 = vpop.f32.mrb[0].mxu0
  %263 = vmatprep.mubr.f32.mxu0 0.0
  %264 = vmatmul.mubr.f32.gmra.mrb[0].mxu0 %v90
  %v265 = vpop.f32.mrb[0].mxu0
  %v266 = vadd.f32 %v65, %v265
  %v267 = vpop.f32.mrb[0].mxu0
  %268 = vmatprep.mubr.f32.mxu0 0.0
  %269 = vmatmul.mubr.f32.gmra.mrb[0].mxu0 %v93
  %v270 = vpop.f32.mrb[0].mxu0
  %v271 = vadd.f32 %v65, %v270
  %v272 = vpop.f32.mrb[0].mxu0
  %273 = vmatprep.mubr.f32.mxu0 0.0
  %274 = vmatmul.mubr.f32.gmra.mrb[0].mxu0 %v96
  %v275 = vpop.f32.mrb[0].mxu0
  %v276 = vadd.f32 %v65, %v275
  %v277 = vpop.f32.mrb[0].mxu0
  %278 = vmatprep.mubr.f32.mxu0 0.0
  %279 = vmatmul.mubr.f32.gmra.mrb[0].mxu0 %v99
  %v280 = vpop.f32.mrb[0].mxu0
  %v281 = vadd.f32 %v65, %v280
  %v282 = vpop.f32.mrb[0].mxu0
  %283 = vmatprep.mubr.f32.mxu0 0.0
  %284 = vmatmul.mubr.f32.gmra.mrb[0].mxu0 %v102
  %v285 = vpop.f32.mrb[0].mxu0
  %v286 = vadd.f32 %v65, %v285
  %v287 = vpop.f32.mrb[0].mxu0
  %288 = vmatprep.mubr.f32.mxu0 0.0
  %289 = vmatmul.mubr.f32.gmra.mrb[0].mxu0 %v105
  %v290 = vpop.f32.mrb[0].mxu0
  %v291 = vadd.f32 %v65, %v290
  %v292 = vpop.f32.mrb[0].mxu0
  %293 = vmatprep.mubr.f32.mxu0 0.0
  %294 = vmatmul.mubr.f32.gmra.mrb[0].mxu0 %v108
  %v295 = vpop.f32.mrb[0].mxu0
  %v296 = vadd.f32 %v65, %v295
  %v297 = vpop.f32.mrb[0].mxu0
  %298 = vmatprep.mubr.f32.mxu0 0.0
  %299 = vmatmul.mubr.f32.gmra.mrb[0].mxu0 %v111
  %v300 = vpop.f32.mrb[0].mxu0
  %v301 = vadd.f32 %v65, %v300
  %v302 = vpop.f32.mrb[0].mxu0
  %303 = vmatprep.mubr.f32.mxu0 0.0
  %304 = vmatmul.mubr.f32.gmra.mrb[0].mxu0 %v114
  %v305 = vpop.f32.mrb[0].mxu0
  %v306 = vadd.f32 %v65, %v305
  %v307 = vpop.f32.mrb[0].mxu0
  %308 = vdwg.mxu0
  %v309 = vmax.f32 %v231, 0.0
  %v310 = vmax.f32 %v236, 0.0
  %v311 = vmax.f32 %v241, 0.0
  %v312 = vmax.f32 %v246, 0.0
  %v313 = vmax.f32 %v251, 0.0
  %v314 = vmax.f32 %v256, 0.0
  %v315 = vmax.f32 %v261, 0.0
  %v316 = vmax.f32 %v266, 0.0
  %v317 = vmax.f32 %v271, 0.0
  %v318 = vmax.f32 %v276, 0.0
  %v319 = vmax.f32 %v281, 0.0
  %v320 = vmax.f32 %v286, 0.0
  %v321 = vmax.f32 %v291, 0.0
  %v322 = vmax.f32 %v296, 0.0
  %v323 = vmax.f32 %v301, 0.0
  %v324 = vmax.f32 %v306, 0.0
  %v325 = vld [vmem:[%s3] sm:$0xff]
  %v326 = vld [vmem:[%s3 + $0x8] sm:$0xff]
  %v327 = vld [vmem:[%s3 + $0x10] sm:$0xff]
  %v328 = vld [vmem:[%s3 + $0x18] sm:$0xff]
  %v329 = vld [vmem:[%s3 + $0x20] sm:$0xff]
  %v330 = vld [vmem:[%s3 + $0x28] sm:$0xff]
  %v331 = vld [vmem:[%s3 + $0x30] sm:$0xff]
  %v332 = vld [vmem:[%s3 + $0x38] sm:$0xff]
  %v333 = vld [vmem:[%s3 + $0x40] sm:$0xff]
  %v334 = vld [vmem:[%s3 + $0x48] sm:$0xff]
  %v335 = vld [vmem:[%s3 + $0x50] sm:$0xff]
  %v336 = vld [vmem:[%s3 + $0x58] sm:$0xff]
  %v337 = vld [vmem:[%s3 + $0x60] sm:$0xff]
  %v338 = vld [vmem:[%s3 + $0x68] sm:$0xff]
  %v339 = vld [vmem:[%s3 + $0x70] sm:$0xff]
  %v340 = vld [vmem:[%s3 + $0x78] sm:$0xff]
  %v341 = vld [vmem:[%s4] sm:$0x1]
  %v343 = vlaneseq
  %v344 = vshrl.u32 %v343, 7
  %v345 = vsub.s32 0, %v344
  %v346 = vrot.slane %v341, %v345
  %348 = vmatprep.subr.mxu0 0.0
  %349 = vmatpush1.xpose.msra.mxu0 %v325
  %350 = vmatprep.subr.mxu0 0.0
  %351 = vmatpush1.xpose.msra.mxu0 %v326
  %352 = vmatprep.subr.mxu0 0.0
  %353 = vmatpush1.xpose.msra.mxu0 %v327
  %354 = vmatprep.subr.mxu0 0.0
  %355 = vmatpush1.xpose.msra.mxu0 %v328
  %356 = vmatprep.subr.mxu0 0.0
  %357 = vmatpush1.xpose.msra.mxu0 %v329
  %358 = vmatprep.subr.mxu0 0.0
  %359 = vmatpush1.xpose.msra.mxu0 %v330
  %360 = vmatprep.subr.mxu0 0.0
  %361 = vmatpush1.xpose.msra.mxu0 %v331
  %362 = vmatprep.subr.mxu0 0.0
  %363 = vmatpush1.xpose.msra.mxu0 %v332
  %364 = vmatprep.subr.mxu0 0.0
  %365 = vmatpush1.xpose.msra.mxu0 %v333
  %366 = vmatprep.subr.mxu0 0.0
  %367 = vmatpush1.xpose.msra.mxu0 %v334
  %368 = vmatprep.subr.mxu0 0.0
  %369 = vmatpush1.xpose.msra.mxu0 %v335
  %370 = vmatprep.subr.mxu0 0.0
  %371 = vmatpush1.xpose.msra.mxu0 %v336
  %372 = vmatprep.subr.mxu0 0.0
  %373 = vmatpush1.xpose.msra.mxu0 %v337
  %374 = vmatprep.subr.mxu0 0.0
  %375 = vmatpush1.xpose.msra.mxu0 %v338
  %376 = vmatprep.subr.mxu0 0.0
  %377 = vmatpush1.xpose.msra.mxu0 %v339
  %378 = vmatprep.subr.mxu0 0.0
  %379 = vmatpush1.xpose.msra.mxu0 %v340
  %380 = vmatprep.subr.mxu0 0.0
  %381 = vmatpush1.xpose.msra.mxu0 0.0
  %382 = vmatprep.subr.mxu0 0.0
  %383 = vmatpush1.xpose.msra.mxu0 0.0
  %384 = vmatprep.subr.mxu0 0.0
  %385 = vmatpush1.xpose.msra.mxu0 0.0
  %386 = vmatprep.subr.mxu0 0.0
  %387 = vmatpush1.xpose.msra.mxu0 0.0
  %388 = vmatprep.subr.mxu0 0.0
  %389 = vmatpush1.xpose.msra.mxu0 0.0
  %390 = vmatprep.subr.mxu0 0.0
  %391 = vmatpush1.xpose.msra.mxu0 0.0
  %392 = vmatprep.subr.mxu0 0.0
  %393 = vmatpush1.xpose.msra.mxu0 0.0
  %394 = vmatprep.subr.mxu0 0.0
  %395 = vmatpush1.xpose.msra.mxu0 0.0
  %396 = vmatprep.subr.mxu0 0.0
  %397 = vmatpush1.xpose.msra.mxu0 0.0
  %398 = vmatprep.subr.mxu0 0.0
  %399 = vmatpush1.xpose.msra.mxu0 0.0
  %400 = vmatprep.subr.mxu0 0.0
  %401 = vmatpush1.xpose.msra.mxu0 0.0
  %402 = vmatprep.subr.mxu0 0.0
  %403 = vmatpush1.xpose.msra.mxu0 0.0
  %404 = vmatprep.subr.mxu0 0.0
  %405 = vmatpush1.xpose.msra.mxu0 0.0
  %406 = vmatprep.subr.mxu0 0.0
  %407 = vmatpush1.xpose.msra.mxu0 0.0
  %408 = vmatprep.subr.mxu0 0.0
  %409 = vmatpush1.xpose.msra.mxu0 0.0
  %410 = vmatprep.subr.mxu0 0.0
  %411 = vmatpush1.xpose.msra.mxu0 0.0
  %412 = vmatprep.mubr.f32.mxu0 0.0
  %413 = vmatmul.mubr.f32.gmra.mrb[0].mxu0 %v309
  %v414 = vpop.f32.mrb[0].mxu0
  %v415 = vadd.f32 %v346, %v414
  %v416 = vpop.f32.mrb[0].mxu0
  %417 = vmatprep.mubr.f32.mxu0 0.0
  %418 = vmatmul.mubr.f32.gmra.mrb[0].mxu0 %v310
  %v419 = vpop.f32.mrb[0].mxu0
  %v420 = vadd.f32 %v346, %v419
  %v421 = vpop.f32.mrb[0].mxu0
  %422 = vmatprep.mubr.f32.mxu0 0.0
  %423 = vmatmul.mubr.f32.gmra.mrb[0].mxu0 %v311
  %v424 = vpop.f32.mrb[0].mxu0
  %v425 = vadd.f32 %v346, %v424
  %v426 = vpop.f32.mrb[0].mxu0
  %427 = vmatprep.mubr.f32.mxu0 0.0
  %428 = vmatmul.mubr.f32.gmra.mrb[0].mxu0 %v312
  %v429 = vpop.f32.mrb[0].mxu0
  %v430 = vadd.f32 %v346, %v429
  %v431 = vpop.f32.mrb[0].mxu0
  %432 = vmatprep.mubr.f32.mxu0 0.0
  %433 = vmatmul.mubr.f32.gmra.mrb[0].mxu0 %v313
  %v434 = vpop.f32.mrb[0].mxu0
  %v435 = vadd.f32 %v346, %v434
  %v436 = vpop.f32.mrb[0].mxu0
  %437 = vmatprep.mubr.f32.mxu0 0.0
  %438 = vmatmul.mubr.f32.gmra.mrb[0].mxu0 %v314
  %v439 = vpop.f32.mrb[0].mxu0
  %v440 = vadd.f32 %v346, %v439
  %v441 = vpop.f32.mrb[0].mxu0
  %442 = vmatprep.mubr.f32.mxu0 0.0
  %443 = vmatmul.mubr.f32.gmra.mrb[0].mxu0 %v315
  %v444 = vpop.f32.mrb[0].mxu0
  %v445 = vadd.f32 %v346, %v444
  %v446 = vpop.f32.mrb[0].mxu0
  %447 = vmatprep.mubr.f32.mxu0 0.0
  %448 = vmatmul.mubr.f32.gmra.mrb[0].mxu0 %v316
  %v449 = vpop.f32.mrb[0].mxu0
  %v450 = vadd.f32 %v346, %v449
  %v451 = vpop.f32.mrb[0].mxu0
  %452 = vmatprep.mubr.f32.mxu0 0.0
  %453 = vmatmul.mubr.f32.gmra.mrb[0].mxu0 %v317
  %v454 = vpop.f32.mrb[0].mxu0
  %v455 = vadd.f32 %v346, %v454
  %v456 = vpop.f32.mrb[0].mxu0
  %457 = vmatprep.mubr.f32.mxu0 0.0
  %458 = vmatmul.mubr.f32.gmra.mrb[0].mxu0 %v318
  %v459 = vpop.f32.mrb[0].mxu0
  %v460 = vadd.f32 %v346, %v459
  %v461 = vpop.f32.mrb[0].mxu0
  %462 = vmatprep.mubr.f32.mxu0 0.0
  %463 = vmatmul.mubr.f32.gmra.mrb[0].mxu0 %v319
  %v464 = vpop.f32.mrb[0].mxu0
  %v465 = vadd.f32 %v346, %v464
  %v466 = vpop.f32.mrb[0].mxu0
  %467 = vmatprep.mubr.f32.mxu0 0.0
  %468 = vmatmul.mubr.f32.gmra.mrb[0].mxu0 %v320
  %v469 = vpop.f32.mrb[0].mxu0
  %v470 = vadd.f32 %v346, %v469
  %v471 = vpop.f32.mrb[0].mxu0
  %472 = vmatprep.mubr.f32.mxu0 0.0
  %473 = vmatmul.mubr.f32.gmra.mrb[0].mxu0 %v321
  %v474 = vpop.f32.mrb[0].mxu0
  %v475 = vadd.f32 %v346, %v474
  %v476 = vpop.f32.mrb[0].mxu0
  %477 = vmatprep.mubr.f32.mxu0 0.0
  %478 = vmatmul.mubr.f32.gmra.mrb[0].mxu0 %v322
  %v479 = vpop.f32.mrb[0].mxu0
  %v480 = vadd.f32 %v346, %v479
  %v481 = vpop.f32.mrb[0].mxu0
  %482 = vmatprep.mubr.f32.mxu0 0.0
  %483 = vmatmul.mubr.f32.gmra.mrb[0].mxu0 %v323
  %v484 = vpop.f32.mrb[0].mxu0
  %v485 = vadd.f32 %v346, %v484
  %v486 = vpop.f32.mrb[0].mxu0
  %487 = vmatprep.mubr.f32.mxu0 0.0
  %488 = vmatmul.mubr.f32.gmra.mrb[0].mxu0 %v324
  %v489 = vpop.f32.mrb[0].mxu0
  %v490 = vadd.f32 %v346, %v489
  %v491 = vpop.f32.mrb[0].mxu0
  %492 = vdwg.mxu0
  %v493 = vmax.f32 %v415, 0.0
  %v494 = vmax.f32 %v420, 0.0
  %v495 = vmax.f32 %v425, 0.0
  %v496 = vmax.f32 %v430, 0.0
  %v497 = vmax.f32 %v435, 0.0
  %v498 = vmax.f32 %v440, 0.0
  %v499 = vmax.f32 %v445, 0.0
  %v500 = vmax.f32 %v450, 0.0
  %v501 = vmax.f32 %v455, 0.0
  %v502 = vmax.f32 %v460, 0.0
  %v503 = vmax.f32 %v465, 0.0
  %v504 = vmax.f32 %v470, 0.0
  %v505 = vmax.f32 %v475, 0.0
  %v506 = vmax.f32 %v480, 0.0
  %v507 = vmax.f32 %v485, 0.0
  %v508 = vmax.f32 %v490, 0.0
  %v509 = vld [vmem:[%s5] sm:$0x1]
  %v510 = vld [vmem:[#allocation2] sm:$0x1]
  %512 = vset.pattern.permute.xlu0 0
  %513 = vperm.xlu0 %512, %v510
  %v514 = vpop.permute.xlu0 %513
  %v516 = vlaneseq
  %v517 = vshrl.u32 %v516, 7
  %v518 = vsub.s32 0, %v517
  %v519 = vrot.slane %v514, %v518
  %520 = vmatprep.subr.mxu0 0.0
  %521 = vmatpush1.xpose.msra.mxu0 %v493
  %522 = vmatprep.subr.mxu0 0.0
  %523 = vmatpush1.xpose.msra.mxu0 %v494
  %524 = vmatprep.subr.mxu0 0.0
  %525 = vmatpush1.xpose.msra.mxu0 %v495
  %526 = vmatprep.subr.mxu0 0.0
  %527 = vmatpush1.xpose.msra.mxu0 %v496
  %528 = vmatprep.subr.mxu0 0.0
  %529 = vmatpush1.xpose.msra.mxu0 %v497
  %530 = vmatprep.subr.mxu0 0.0
  %531 = vmatpush1.xpose.msra.mxu0 %v498
  %532 = vmatprep.subr.mxu0 0.0
  %533 = vmatpush1.xpose.msra.mxu0 %v499
  %534 = vmatprep.subr.mxu0 0.0
  %535 = vmatpush1.xpose.msra.mxu0 %v500
  %536 = vmatprep.subr.mxu0 0.0
  %537 = vmatpush1.xpose.msra.mxu0 %v501
  %538 = vmatprep.subr.mxu0 0.0
  %539 = vmatpush1.xpose.msra.mxu0 %v502
  %540 = vmatprep.subr.mxu0 0.0
  %541 = vmatpush1.xpose.msra.mxu0 %v503
  %542 = vmatprep.subr.mxu0 0.0
  %543 = vmatpush1.xpose.msra.mxu0 %v504
  %544 = vmatprep.subr.mxu0 0.0
  %545 = vmatpush1.xpose.msra.mxu0 %v505
  %546 = vmatprep.subr.mxu0 0.0
  %547 = vmatpush1.xpose.msra.mxu0 %v506
  %548 = vmatprep.subr.mxu0 0.0
  %549 = vmatpush1.xpose.msra.mxu0 %v507
  %550 = vmatprep.subr.mxu0 0.0
  %551 = vmatpush1.xpose.msra.mxu0 %v508
  %552 = vmatprep.subr.mxu0 0.0
  %553 = vmatpush1.xpose.msra.mxu0 0.0
  %554 = vmatprep.subr.mxu0 0.0
  %555 = vmatpush1.xpose.msra.mxu0 0.0
  %556 = vmatprep.subr.mxu0 0.0
  %557 = vmatpush1.xpose.msra.mxu0 0.0
  %558 = vmatprep.subr.mxu0 0.0
  %559 = vmatpush1.xpose.msra.mxu0 0.0
  %560 = vmatprep.subr.mxu0 0.0
  %561 = vmatpush1.xpose.msra.mxu0 0.0
  %562 = vmatprep.subr.mxu0 0.0
  %563 = vmatpush1.xpose.msra.mxu0 0.0
  %564 = vmatprep.subr.mxu0 0.0
  %565 = vmatpush1.xpose.msra.mxu0 0.0
  %566 = vmatprep.subr.mxu0 0.0
  %567 = vmatpush1.xpose.msra.mxu0 0.0
  %568 = vmatprep.subr.mxu0 0.0
  %569 = vmatpush1.xpose.msra.mxu0 0.0
  %570 = vmatprep.subr.mxu0 0.0
  %571 = vmatpush1.xpose.msra.mxu0 0.0
  %572 = vmatprep.subr.mxu0 0.0
  %573 = vmatpush1.xpose.msra.mxu0 0.0
  %574 = vmatprep.subr.mxu0 0.0
  %575 = vmatpush1.xpose.msra.mxu0 0.0
  %576 = vmatprep.subr.mxu0 0.0
  %577 = vmatpush1.xpose.msra.mxu0 0.0
  %578 = vmatprep.subr.mxu0 0.0
  %579 = vmatpush1.xpose.msra.mxu0 0.0
  %580 = vmatprep.subr.mxu0 0.0
  %581 = vmatpush1.xpose.msra.mxu0 0.0
  %582 = vmatprep.subr.mxu0 0.0
  %583 = vmatpush1.xpose.msra.mxu0 0.0
  %584 = vmatprep.mubr.f32.mxu0 0.0
  %585 = vmatmul.mubr.f32.gmra.mrb[0].mxu0 %v509
  %v586 = vpop.f32.mrb[0].mxu0
  %v587 = vadd.f32 %v519, %v586
  %v588 = vpop.f32.mrb[0].mxu0
  %589 = vdwg.mxu0
  %v590 = vxor.u32 %v587, 2147483648
  %v591 = vmul.f32 %v590, 1.442695
  %v592 = vpow.pop %v591
  %v593 = vadd.f32 %v592, 1.0
  %v594 = vrcp.pop %v593
  %v595 = vmul.f32 1.0, %v594
  %596 = vst [vmem:[%s7] sm:$0x1] %v595
  // Predicated region
  $region30: #{single_layer_classifier_forward.1} parent=0 // pred_check
    _
  $region31: #{single_layer_classifier_forward.1} parent=0 // pred_check_branch
    %598 = sbr.rel (0) target = $region33
  $region32: #{single_layer_classifier_forward.1} parent=0 // pred_region
    _
  $region33: #{single_layer_classifier_forward.1} parent=0 // pred_fallthru
    _
  // Predicated region
  $region34: #{single_layer_classifier_forward.1} parent=0 // pred_check
    _
  $region35: #{single_layer_classifier_forward.1} parent=0 // pred_check_branch
    %600 = sbr.rel (0) target = $region37
  $region36: #{single_layer_classifier_forward.1} parent=0 // pred_region
    _
  $region37: #{single_layer_classifier_forward.1} parent=0 // pred_fallthru
    _

</llo_original>
